<compile_context>
chip_gen: v7x
topology: tpu7x:2x2x1
jax: 0.10.0
libtpu: 0.0.40
codegen_flags: <defaults>
</compile_context>

<pallas_src>
import jax
import jax.numpy as jnp
from jax.experimental import pallas as pl
from jax.experimental.pallas import tpu as pltpu


def _corr_kernel(f1_ref, m1_ref, f2_ref, m2_ref, cv_ref, cvm_ref):
    """One (batch, row-tile, displacement) grid step.

    f1_ref  : (c,  TR, LANE)  frame-1 features
    m1_ref  : (ca, TR, LANE)  frame-1 visibility mask
    f2_ref  : (c,  TR, LANE)  displaced frame-2 feature window
    m2_ref  : (ca, TR, LANE)  displaced frame-2 mask window
    cv_ref  : (TR, LANE)      cost-volume tile
    cvm_ref : (TR, LANE)      cost-volume-mask tile
    """
    cv_ref[...] = jnp.mean(f1_ref[...] * f2_ref[...], axis=0).astype(cv_ref.dtype)
    m = jnp.sum(m1_ref[...] * m2_ref[...], axis=0)
    cvm_ref[...] = jnp.clip(m, 0.0, 1.0).astype(cvm_ref.dtype)


def _pick_row_tile(rows):
    for cand in (512, 256, 128, 64, 32, 16, 8):
        if rows % cand == 0:
            return cand
    return rows


def correlation_layer(input_batch, *, max_disp_spatial, max_disp_depth):
    """JAX/Pallas equivalent of CorrelationLayer.forward."""
    f1 = input_batch["mpi1_features"]
    a1 = input_batch["mpi1_alpha"]
    f2 = input_batch["mpi2_features"]
    a2 = input_batch["mpi2_alpha"]

    b, c, h, w, d = f1.shape
    ca = a1.shape[1]
    S = 2 * max_disp_spatial + 1
    Dd = 2 * max_disp_depth + 1
    n_out = Dd * S * S
    L = h * w * d

    # ---- glue (pure JAX): masks, constant padding, displacement windows ----
    mask1 = jnp.clip(jnp.sum(a1, axis=-1, keepdims=True), 0.0, 1.0)
    mask2 = jnp.clip(jnp.sum(a2, axis=-1, keepdims=True), 0.0, 1.0)
    # Broadcast both to a1.shape to match the PyTorch module exactly.
    mask1 = jnp.broadcast_to(mask1, a1.shape)
    mask2 = jnp.broadcast_to(mask2, a1.shape)

    pad = ((0, 0), (0, 0),
           (max_disp_spatial, max_disp_spatial),
           (max_disp_spatial, max_disp_spatial),
           (max_disp_depth, max_disp_depth))
    f2p = jnp.pad(f2, pad, mode="constant", constant_values=0.0)
    m2p = jnp.pad(mask2, pad, mode="constant", constant_values=1.0)

    # Lane-dense flattening: (h, w, d) -> (rows, LANE) with LANE = 128 when possible.
    lane = 128 if L % 128 == 0 else L
    rows = L // lane
    tr = _pick_row_tile(rows)
    row_tiles = rows // tr

    f1r = f1.reshape(b, c, rows, lane)
    m1r = mask1.reshape(b, ca, rows, lane)

    # Displacement windows, PyTorch ordering: k (depth) outer, i (h), j (w) inner.
    wf, wm = [], []
    for k in range(Dd):
        for i in range(S):
            for j in range(S):
                wf.append(f2p[:, :, i:i + h, j:j + w, k:k + d].reshape(b, c, rows, lane))
                wm.append(m2p[:, :, i:i + h, j:j + w, k:k + d].reshape(b, ca, rows, lane))
    f2w = jnp.stack(wf, axis=1)   # (b, n_out, c,  rows, lane)
    m2w = jnp.stack(wm, axis=1)   # (b, n_out, ca, rows, lane)

    cost = pl.CostEstimate(
        flops=2 * b * n_out * (c + ca) * L,
        transcendentals=0,
        bytes_accessed=4 * (b * (c + ca) * L
                            + b * n_out * (c + ca) * L
                            + 2 * b * n_out * L),
    )

    cv_flat, cvm_flat = pl.pallas_call(
        _corr_kernel,
        out_shape=(
            jax.ShapeDtypeStruct((b, n_out, rows, lane), f1.dtype),
            jax.ShapeDtypeStruct((b, n_out, rows, lane), f1.dtype),
        ),
        grid_spec=pltpu.PrefetchScalarGridSpec(
            num_scalar_prefetch=0,
            # Displacement axis innermost: f1/m1 block indices are unchanged
            # across consecutive steps -> Pallas skips re-fetching them.
            grid=(b, row_tiles, n_out),
            in_specs=[
                pl.BlockSpec((None, c, tr, lane),
                             lambda bi, ri, ni: (bi, 0, ri, 0)),
                pl.BlockSpec((None, ca, tr, lane),
                             lambda bi, ri, ni: (bi, 0, ri, 0)),
                pl.BlockSpec((None, None, c, tr, lane),
                             lambda bi, ri, ni: (bi, ni, 0, ri, 0)),
                pl.BlockSpec((None, None, ca, tr, lane),
                             lambda bi, ri, ni: (bi, ni, 0, ri, 0)),
            ],
            out_specs=[
                pl.BlockSpec((None, None, tr, lane),
                             lambda bi, ri, ni: (bi, ni, ri, 0)),
                pl.BlockSpec((None, None, tr, lane),
                             lambda bi, ri, ni: (bi, ni, ri, 0)),
            ],
        ),
        compiler_params=pltpu.CompilerParams(
            dimension_semantics=("parallel", "parallel", "arbitrary"),
            vmem_limit_bytes=32 * 1024 * 1024,   # well under v7x's 64 MiB
        ),
        cost_estimate=cost,
    )(f1r, m1r, f2w, m2w)

    cv = cv_flat.reshape(b, n_out, h, w, d)
    cvm = cvm_flat.reshape(b, n_out, h, w, d)
    return {"cost_volume": cv, "cost_volume_mask": cvm}


# ---------------------------- pure-JAX reference ----------------------------
def correlation_layer_ref(input_batch, *, max_disp_spatial, max_disp_depth):
    f1 = input_batch["mpi1_features"]
    a1 = input_batch["mpi1_alpha"]
    f2 = input_batch["mpi2_features"]
    a2 = input_batch["mpi2_alpha"]
    b, c, h, w, d = f1.shape
    S = 2 * max_disp_spatial + 1
    Dd = 2 * max_disp_depth + 1

    mask1 = jnp.clip(jnp.sum(a1, axis=-1, keepdims=True), 0.0, 1.0)
    mask2 = jnp.clip(jnp.sum(a2, axis=-1, keepdims=True), 0.0, 1.0)
    mask1 = jnp.broadcast_to(mask1, a1.shape)
    mask2 = jnp.broadcast_to(mask2, a1.shape)

    pad = ((0, 0), (0, 0),
           (max_disp_spatial, max_disp_spatial),
           (max_disp_spatial, max_disp_spatial),
           (max_disp_depth, max_disp_depth))
    f2p = jnp.pad(f2, pad, constant_values=0.0)
    m2p = jnp.pad(mask2, pad, constant_values=1.0)

    cv, cvm = [], []
    for k in range(Dd):
        for i in range(S):
            for j in range(S):
                cost = f1 * f2p[:, :, i:i + h, j:j + w, k:k + d]
                cmask = mask1 * m2p[:, :, i:i + h, j:j + w, k:k + d]
                cv.append(jnp.mean(cost, axis=1, keepdims=True))
                cvm.append(jnp.clip(jnp.sum(cmask, axis=1, keepdims=True), 0.0, 1.0))
    return {"cost_volume": jnp.concatenate(cv, axis=1),
            "cost_volume_mask": jnp.concatenate(cvm, axis=1)}


if __name__ == "__main__":
    # deterministic "configs"
    max_disp_spatial = 1   # search_range_spatial -> S = 3
    max_disp_depth = 1     # search_range_depth   -> Dd = 3

    b, c, ca, h, w, d = 2, 4, 1, 8, 8, 8
    key = jax.random.PRNGKey(0)
    k1, k2, k3, k4 = jax.random.split(key, 4)
    input_batch = {
        "mpi1_features": jax.random.normal(k1, (b, c, h, w, d), dtype=jnp.float32),
        "mpi1_alpha": jax.random.uniform(k2, (b, ca, h, w, d), dtype=jnp.float32),
        "mpi2_features": jax.random.normal(k3, (b, c, h, w, d), dtype=jnp.float32),
        "mpi2_alpha": jax.random.uniform(k4, (b, ca, h, w, d), dtype=jnp.float32),
    }

    out = correlation_layer(input_batch,
                            max_disp_spatial=max_disp_spatial,
                            max_disp_depth=max_disp_depth)
    jax.block_until_ready(out)

    ref = correlation_layer_ref(input_batch,
                                max_disp_spatial=max_disp_spatial,
                                max_disp_depth=max_disp_depth)

    assert out["cost_volume"].shape == (b, 27, h, w, d)
    assert out["cost_volume_mask"].shape == (b, 27, h, w, d)
    assert jnp.allclose(out["cost_volume"], ref["cost_volume"], atol=1e-5, rtol=1e-5)
    assert jnp.allclose(out["cost_volume_mask"], ref["cost_volume_mask"],
                        atol=1e-5, rtol=1e-5)

    print("KERNEL_OK")
</pallas_src>

<mosaic_0001>
module attributes {stable_mosaic.version = 11 : i64} {
  func.func @_corr_kernel(%arg0: i32, %arg1: i32, %arg2: i32, %arg3: memref<1x4x4x128xf32, #tpu.memory_space<vmem>>, %arg4: memref<1x1x4x128xf32, #tpu.memory_space<vmem>>, %arg5: memref<1x1x4x4x128xf32, #tpu.memory_space<vmem>>, %arg6: memref<1x1x1x4x128xf32, #tpu.memory_space<vmem>>, %arg7: memref<1x1x4x128xf32, #tpu.memory_space<vmem>>, %arg8: memref<1x1x4x128xf32, #tpu.memory_space<vmem>>) attributes {dimension_semantics = [#tpu.dimension_semantics<parallel>, #tpu.dimension_semantics<parallel>, #tpu.dimension_semantics<arbitrary>], iteration_bounds = array<i64: 2, 1, 27>, scalar_prefetch = 0 : i64, scratch_operands = 0 : i64, tpu.core_type = #tpu.core_type<tc>, window_params = [{transform_indices = @transform_0, window_bounds = array<i64: 1, 4, 4, 128>}, {transform_indices = @transform_1, window_bounds = array<i64: 1, 1, 4, 128>}, {transform_indices = @transform_2, window_bounds = array<i64: 1, 1, 4, 4, 128>}, {transform_indices = @transform_3, window_bounds = array<i64: 1, 1, 1, 4, 128>}, {transform_indices = @transform_4, window_bounds = array<i64: 1, 1, 4, 128>}, {transform_indices = @transform_5, window_bounds = array<i64: 1, 1, 4, 128>}]} {
    %c0 = arith.constant 0 : index
    %c0_0 = arith.constant 0 : index
    %c0_1 = arith.constant 0 : index
    %c0_2 = arith.constant 0 : index
    %0 = vector.load %arg3[%c0, %c0_0, %c0_1, %c0_2] : memref<1x4x4x128xf32, #tpu.memory_space<vmem>>, vector<1x4x4x128xf32>
    %1 = vector.shape_cast %0 : vector<1x4x4x128xf32> to vector<4x4x128xf32>
    %c0_3 = arith.constant 0 : index
    %c0_4 = arith.constant 0 : index
    %c0_5 = arith.constant 0 : index
    %c0_6 = arith.constant 0 : index
    %c0_7 = arith.constant 0 : index
    %2 = vector.load %arg5[%c0_3, %c0_4, %c0_5, %c0_6, %c0_7] : memref<1x1x4x4x128xf32, #tpu.memory_space<vmem>>, vector<1x1x4x4x128xf32>
    %3 = vector.shape_cast %2 : vector<1x1x4x4x128xf32> to vector<4x4x128xf32>
    %4 = arith.mulf %1, %3 : vector<4x4x128xf32>
    %cst = arith.constant dense<0.000000e+00> : vector<4x128xf32>
    %5 = vector.multi_reduction <add>, %4, %cst [0] : vector<4x4x128xf32> to vector<4x128xf32>
    %cst_8 = arith.constant 4.000000e+00 : f32
    %6 = vector.broadcast %cst_8 : f32 to vector<4x128xf32>
    %7 = arith.divf %5, %6 : vector<4x128xf32>
    %c0_9 = arith.constant 0 : index
    %c0_10 = arith.constant 0 : index
    %c0_11 = arith.constant 0 : index
    %c0_12 = arith.constant 0 : index
    %8 = vector.load %arg7[%c0_9, %c0_10, %c0_11, %c0_12] : memref<1x1x4x128xf32, #tpu.memory_space<vmem>>, vector<1x1x4x128xf32>
    %9 = vector.shape_cast %8 : vector<1x1x4x128xf32> to vector<4x128xf32>
    %10 = vector.shape_cast %7 : vector<4x128xf32> to vector<1x1x4x128xf32>
    tpu.vector_store %arg7[%c0_9, %c0_10, %c0_11, %c0_12], %10 {strides = array<i32>} : memref<1x1x4x128xf32, #tpu.memory_space<vmem>>, vector<1x1x4x128xf32>,
    %c0_13 = arith.constant 0 : index
    %c0_14 = arith.constant 0 : index
    %c0_15 = arith.constant 0 : index
    %c0_16 = arith.constant 0 : index
    %11 = vector.load %arg4[%c0_13, %c0_14, %c0_15, %c0_16] : memref<1x1x4x128xf32, #tpu.memory_space<vmem>>, vector<1x1x4x128xf32>
    %12 = vector.shape_cast %11 : vector<1x1x4x128xf32> to vector<1x4x128xf32>
    %c0_17 = arith.constant 0 : index
    %c0_18 = arith.constant 0 : index
    %c0_19 = arith.constant 0 : index
    %c0_20 = arith.constant 0 : index
    %c0_21 = arith.constant 0 : index
    %13 = vector.load %arg6[%c0_17, %c0_18, %c0_19, %c0_20, %c0_21] : memref<1x1x1x4x128xf32, #tpu.memory_space<vmem>>, vector<1x1x1x4x128xf32>
    %14 = vector.shape_cast %13 : vector<1x1x1x4x128xf32> to vector<1x4x128xf32>
    %15 = arith.mulf %12, %14 : vector<1x4x128xf32>
    %cst_22 = arith.constant dense<0.000000e+00> : vector<4x128xf32>
    %16 = vector.multi_reduction <add>, %15, %cst_22 [0] : vector<1x4x128xf32> to vector<4x128xf32>
    %cst_23 = arith.constant 0.000000e+00 : f32
    %cst_24 = arith.constant 1.000000e+00 : f32
    %17 = vector.broadcast %cst_23 : f32 to vector<4x128xf32>
    %18 = arith.maximumf %17, %16 : vector<4x128xf32>
    %19 = vector.broadcast %cst_24 : f32 to vector<4x128xf32>
    %20 = arith.minimumf %19, %18 : vector<4x128xf32>
    %c0_25 = arith.constant 0 : index
    %c0_26 = arith.constant 0 : index
    %c0_27 = arith.constant 0 : index
    %c0_28 = arith.constant 0 : index
    %21 = vector.load %arg8[%c0_25, %c0_26, %c0_27, %c0_28] : memref<1x1x4x128xf32, #tpu.memory_space<vmem>>, vector<1x1x4x128xf32>
    %22 = vector.shape_cast %21 : vector<1x1x4x128xf32> to vector<4x128xf32>
    %23 = vector.shape_cast %20 : vector<4x128xf32> to vector<1x1x4x128xf32>
    tpu.vector_store %arg8[%c0_25, %c0_26, %c0_27, %c0_28], %23 {strides = array<i32>} : memref<1x1x4x128xf32, #tpu.memory_space<vmem>>, vector<1x1x4x128xf32>,
    return
  }
  func.func @transform_0(%arg0: i32, %arg1: i32, %arg2: i32) -> (i32, i32, i32, i32) {
    %c0_i32 = arith.constant 0 : i32
    %c0_i32_0 = arith.constant 0 : i32
    %c0_i32_1 = arith.constant 0 : i32
    return %arg0, %c0_i32, %arg1, %c0_i32_0 : i32, i32, i32, i32
  }
  func.func @transform_1(%arg0: i32, %arg1: i32, %arg2: i32) -> (i32, i32, i32, i32) {
    %c0_i32 = arith.constant 0 : i32
    %c0_i32_0 = arith.constant 0 : i32
    %c0_i32_1 = arith.constant 0 : i32
    return %arg0, %c0_i32, %arg1, %c0_i32_0 : i32, i32, i32, i32
  }
  func.func @transform_2(%arg0: i32, %arg1: i32, %arg2: i32) -> (i32, i32, i32, i32, i32) {
    %c0_i32 = arith.constant 0 : i32
    %c0_i32_0 = arith.constant 0 : i32
    %c0_i32_1 = arith.constant 0 : i32
    return %arg0, %arg2, %c0_i32, %arg1, %c0_i32_0 : i32, i32, i32, i32, i32
  }
  func.func @transform_3(%arg0: i32, %arg1: i32, %arg2: i32) -> (i32, i32, i32, i32, i32) {
    %c0_i32 = arith.constant 0 : i32
    %c0_i32_0 = arith.constant 0 : i32
    %c0_i32_1 = arith.constant 0 : i32
    return %arg0, %arg2, %c0_i32, %arg1, %c0_i32_0 : i32, i32, i32, i32, i32
  }
  func.func @transform_4(%arg0: i32, %arg1: i32, %arg2: i32) -> (i32, i32, i32, i32) {
    %c0_i32 = arith.constant 0 : i32
    %c0_i32_0 = arith.constant 0 : i32
    return %arg0, %arg2, %arg1, %c0_i32 : i32, i32, i32, i32
  }
  func.func @transform_5(%arg0: i32, %arg1: i32, %arg2: i32) -> (i32, i32, i32, i32) {
    %c0_i32 = arith.constant 0 : i32
    %c0_i32_0 = arith.constant 0 : i32
    return %arg0, %arg2, %arg1, %c0_i32 : i32, i32, i32, i32
  }
}

</mosaic_0001>

<llo_original>
// kernel: tpu_custom_call.1
$region0: #{tpu_custom_call.1}
  #allocation0 [shape = 'u32[]', space=smem, size = 0x4, offset = 0x4, fixed_abs, tag = 'smem constant byte address 0x4 - core index']
  #allocation1 [shape = 'u32[144,128]{1,0:T(1,128)}', space=vmem, size = 0x12000, scoped, tag = 'internal scratch']
  %s0 = inlined_call_operand.hbm [shape: f32[2,4,4,128], index: 0, kind: input, shape index: {}]
  %s1 = inlined_call_operand.hbm [shape: f32[2,1,4,128], index: 1, kind: input, shape index: {}]
  %s2 = inlined_call_operand.hbm [shape: f32[2,27,4,4,128], index: 2, kind: input, shape index: {}]
  %s3 = inlined_call_operand.hbm [shape: f32[2,27,1,4,128], index: 3, kind: input, shape index: {}]
  %s4 = inlined_call_operand.hbm [shape: f32[2,27,4,128], index: 4, kind: output, shape index: {0}]
  %s5 = inlined_call_operand.hbm [shape: f32[2,27,4,128], index: 5, kind: output, shape index: {1}]
  %6 = xla_tuple %s4, %s5
  %s7 = sld [smem:[#allocation0]]
  $region73: #{tpu_custom_call.1} parent=0
    _
  %s9 = ssub.s32 1, %s7
  %s10 = scalar_select 0, %s9, %s7
  $region1: #{tpu_custom_call.1} parent=0
    #allocation2 [shape = 'u8[16384]{0}', space=vmem, size = 0x4000, scoped, tag = 'input window, operand 0']
    #allocation3 [shape = 's32[2]{0}', space=sflag, size = 0x8, scoped, tag = 'scoped memory for tpu_custom_call.1']
    #allocation4 [shape = 's32[2]{0}', space=sflag, size = 0x8, scoped, tag = 'scoped memory for tpu_custom_call.1']
    #allocation5 [shape = 'u8[4096]{0}', space=vmem, size = 0x1000, scoped, tag = 'input window, operand 1']
    #allocation6 [shape = 's32[2]{0}', space=sflag, size = 0x8, scoped, tag = 'scoped memory for tpu_custom_call.1']
    #allocation7 [shape = 'u8[16384]{0}', space=vmem, size = 0x4000, scoped, tag = 'input window, operand 2']
    #allocation8 [shape = 'u8[4096]{0}', space=vmem, size = 0x1000, scoped, tag = 'input window, operand 3']
    #allocation9 [shape = 's32[2]{0}', space=sflag, size = 0x8, scoped, tag = 'scoped memory for tpu_custom_call.1']
    #allocation10 [shape = 'u8[4096]{0}', space=vmem, size = 0x1000, scoped, tag = 'output window, operand 0']
    #allocation11 [shape = 'u8[4096]{0}', space=vmem, size = 0x1000, scoped, tag = 'output window, operand 1']
    #allocation12 [shape = 's32[2]{0}', space=sflag, size = 0x8, scoped, tag = 'scoped memory for tpu_custom_call.1']
    %11 = vsyncpa [#allocation3], 0
    %s12 = scalar_lea.sflag [#allocation3], 1
    %13 = vsyncpa %s12, 0
    %14 = vsyncpa [#allocation6], 0
    %s15 = scalar_lea.sflag [#allocation6], 1
    %16 = vsyncpa %s15, 0
    %17 = vsyncpa [#allocation9], 0
    %s18 = scalar_lea.sflag [#allocation9], 1
    %19 = vsyncpa %s18, 0
    %20 = vsyncpa [#allocation4], 0
    %s21 = scalar_lea.sflag [#allocation4], 1
    %22 = vsyncpa %s21, 0
    %23 = vsyncpa [#allocation12], 0
    %s24 = scalar_lea.sflag [#allocation12], 1
    %25 = vsyncpa %s24, 0
    loop: start=0, step=1, limit=56
    $region2: #{tpu_custom_call.1} parent=1 // loop_pre_header
      _
    $region3: #{tpu_custom_call.1} parent=1 // loop_header
      %s27 = sphi 0, %s31
      %p28 = scmp.ge.s32.totalorder %s27, 56
      %s34 = sphi 0, %s53
      %s35 = sphi 0, %s49
      %s36 = sphi 0, %s45
      %s37 = sphi 0, %s34
      %s38 = sphi 0, %s35
      %s39 = sphi 0, %s36
      %s40 = sphi 0, %s37
      %s41 = sphi 0, %s38
      %s42 = sphi 0, %s39
      %s58 = sphi 0, %s60
      %s61 = sphi 0, %s58
      %s62 = sphi 0, %s61
      %s78 = sphi 0, %s62
      %s86 = sphi 0, %s88
      %s89 = sphi 0, %s86
      %s90 = sphi 0, %s89
      %s106 = sphi 0, %s90
      %s116 = sphi 0, %s118
      %s119 = sphi 0, %s116
      %s120 = sphi 0, %s119
      %s136 = sphi 0, %s120
      %s146 = sphi 0, %s148
      %s149 = sphi 0, %s146
      %s150 = sphi 0, %s149
      %s166 = sphi 0, %s150
      %s176 = sphi 0, %s178
      %s179 = sphi 0, %s176
      %s180 = sphi 0, %s179
      %s196 = sphi 0, %s180
      %s206 = sphi 0, %s208
      %s209 = sphi 0, %s206
      %s210 = sphi 0, %s209
      %s226 = sphi 0, %s210
    $region4: #{tpu_custom_call.1} parent=1 // loop_header_branch
      %30 = sbr.rel (%p28) target = $region8
    $region5: #{tpu_custom_call.1} parent=1 // loop_body
      %s32 = ssub.s32 %s27, 1
      %s33 = ssub.s32 %s27, 2
      %s43 = sadd.s32 1, %s36
      %p44 = scmp.ge.s32.totalorder %s43, 27
      %s45 = scalar_select %p44, 0, %s43
      %s46 = sadd.s32 1, %s35
      %s47 = scalar_select %p44, %s46, %s35
      %p48 = scmp.ge.s32.totalorder %s47, 1
      %s49 = scalar_select %p48, 0, %s47
      %s50 = sadd.s32 1, %s34
      %s51 = scalar_select %p48, %s50, %s34
      %p52 = scmp.ge.s32.totalorder %s51, 2
      %s53 = scalar_select %p52, 0, %s51
      %s54 = ssub.s32 %s34, %s53
      %s55 = ssub.s32 %s35, %s49
      %s56 = sor.u32 %s54, %s55
      %p57 = scmp.eq.s32.totalorder %s56, 0
      %s59 = sadd.s32 %s58, 1
      %s60 = scalar_select %p57, %s58, %s59
      %p63 = pneg %p57
      %p64 = scmp.eq.s32.totalorder %s27, 53
      %p65 = por %p63, %p64
      %p66 = scmp.ne.s32.totalorder %s58, %s61
      %p67 = scmp.eq.s32.totalorder %s27, 0
      %p68 = por %p66, %p67
      %p69 = scmp.ne.s32.totalorder %s58, %s61
      %p70 = scmp.eq.s32.totalorder %s32, 53
      %p71 = por %p69, %p70
      %p72 = scmp.ne.s32.totalorder %s61, %s62
      %p73 = scmp.eq.s32.totalorder %s32, 0
      %p74 = por %p72, %p73
      %p75 = scmp.ne.s32.totalorder %s61, %s62
      %p76 = scmp.eq.s32.totalorder %s33, 53
      %p77 = por %p75, %p76
      %p79 = scmp.ne.s32.totalorder %s62, %s78
      %p80 = scmp.eq.s32.totalorder %s33, 0
      %p81 = por %p79, %p80
      %s82 = ssub.s32 %s34, %s53
      %s83 = ssub.s32 %s35, %s49
      %s84 = sor.u32 %s82, %s83
      %p85 = scmp.eq.s32.totalorder %s84, 0
      %s87 = sadd.s32 %s86, 1
      %s88 = scalar_select %p85, %s86, %s87
      %p91 = pneg %p85
      %p92 = scmp.eq.s32.totalorder %s27, 53
      %p93 = por %p91, %p92
      %p94 = scmp.ne.s32.totalorder %s86, %s89
      %p95 = scmp.eq.s32.totalorder %s27, 0
      %p96 = por %p94, %p95
      %p97 = scmp.ne.s32.totalorder %s86, %s89
      %p98 = scmp.eq.s32.totalorder %s32, 53
      %p99 = por %p97, %p98
      %p100 = scmp.ne.s32.totalorder %s89, %s90
      %p101 = scmp.eq.s32.totalorder %s32, 0
      %p102 = por %p100, %p101
      %p103 = scmp.ne.s32.totalorder %s89, %s90
      %p104 = scmp.eq.s32.totalorder %s33, 53
      %p105 = por %p103, %p104
      %p107 = scmp.ne.s32.totalorder %s90, %s106
      %p108 = scmp.eq.s32.totalorder %s33, 0
      %p109 = por %p107, %p108
      %s110 = ssub.s32 %s34, %s53
      %s111 = ssub.s32 %s36, %s45
      %s112 = sor.u32 %s110, %s111
      %s113 = ssub.s32 %s35, %s49
      %s114 = sor.u32 %s112, %s113
      %p115 = scmp.eq.s32.totalorder %s114, 0
      %s117 = sadd.s32 %s116, 1
      %s118 = scalar_select %p115, %s116, %s117
      %p121 = pneg %p115
      %p122 = scmp.eq.s32.totalorder %s27, 53
      %p123 = por %p121, %p122
      %p124 = scmp.ne.s32.totalorder %s116, %s119
      %p125 = scmp.eq.s32.totalorder %s27, 0
      %p126 = por %p124, %p125
      %p127 = scmp.ne.s32.totalorder %s116, %s119
      %p128 = scmp.eq.s32.totalorder %s32, 53
      %p129 = por %p127, %p128
      %p130 = scmp.ne.s32.totalorder %s119, %s120
      %p131 = scmp.eq.s32.totalorder %s32, 0
      %p132 = por %p130, %p131
      %p133 = scmp.ne.s32.totalorder %s119, %s120
      %p134 = scmp.eq.s32.totalorder %s33, 53
      %p135 = por %p133, %p134
      %p137 = scmp.ne.s32.totalorder %s120, %s136
      %p138 = scmp.eq.s32.totalorder %s33, 0
      %p139 = por %p137, %p138
      %s140 = ssub.s32 %s34, %s53
      %s141 = ssub.s32 %s36, %s45
      %s142 = sor.u32 %s140, %s141
      %s143 = ssub.s32 %s35, %s49
      %s144 = sor.u32 %s142, %s143
      %p145 = scmp.eq.s32.totalorder %s144, 0
      %s147 = sadd.s32 %s146, 1
      %s148 = scalar_select %p145, %s146, %s147
      %p151 = pneg %p145
      %p152 = scmp.eq.s32.totalorder %s27, 53
      %p153 = por %p151, %p152
      %p154 = scmp.ne.s32.totalorder %s146, %s149
      %p155 = scmp.eq.s32.totalorder %s27, 0
      %p156 = por %p154, %p155
      %p157 = scmp.ne.s32.totalorder %s146, %s149
      %p158 = scmp.eq.s32.totalorder %s32, 53
      %p159 = por %p157, %p158
      %p160 = scmp.ne.s32.totalorder %s149, %s150
      %p161 = scmp.eq.s32.totalorder %s32, 0
      %p162 = por %p160, %p161
      %p163 = scmp.ne.s32.totalorder %s149, %s150
      %p164 = scmp.eq.s32.totalorder %s33, 53
      %p165 = por %p163, %p164
      %p167 = scmp.ne.s32.totalorder %s150, %s166
      %p168 = scmp.eq.s32.totalorder %s33, 0
      %p169 = por %p167, %p168
      %s170 = ssub.s32 %s34, %s53
      %s171 = ssub.s32 %s36, %s45
      %s172 = sor.u32 %s170, %s171
      %s173 = ssub.s32 %s35, %s49
      %s174 = sor.u32 %s172, %s173
      %p175 = scmp.eq.s32.totalorder %s174, 0
      %s177 = sadd.s32 %s176, 1
      %s178 = scalar_select %p175, %s176, %s177
      %p181 = pneg %p175
      %p182 = scmp.eq.s32.totalorder %s27, 53
      %p183 = por %p181, %p182
      %p184 = scmp.ne.s32.totalorder %s176, %s179
      %p185 = scmp.eq.s32.totalorder %s27, 0
      %p186 = por %p184, %p185
      %p187 = scmp.ne.s32.totalorder %s176, %s179
      %p188 = scmp.eq.s32.totalorder %s32, 53
      %p189 = por %p187, %p188
      %p190 = scmp.ne.s32.totalorder %s179, %s180
      %p191 = scmp.eq.s32.totalorder %s32, 0
      %p192 = por %p190, %p191
      %p193 = scmp.ne.s32.totalorder %s179, %s180
      %p194 = scmp.eq.s32.totalorder %s33, 53
      %p195 = por %p193, %p194
      %p197 = scmp.ne.s32.totalorder %s180, %s196
      %p198 = scmp.eq.s32.totalorder %s33, 0
      %p199 = por %p197, %p198
      %s200 = ssub.s32 %s34, %s53
      %s201 = ssub.s32 %s36, %s45
      %s202 = sor.u32 %s200, %s201
      %s203 = ssub.s32 %s35, %s49
      %s204 = sor.u32 %s202, %s203
      %p205 = scmp.eq.s32.totalorder %s204, 0
      %s207 = sadd.s32 %s206, 1
      %s208 = scalar_select %p205, %s206, %s207
      %p211 = pneg %p205
      %p212 = scmp.eq.s32.totalorder %s27, 53
      %p213 = por %p211, %p212
      %p214 = scmp.ne.s32.totalorder %s206, %s209
      %p215 = scmp.eq.s32.totalorder %s27, 0
      %p216 = por %p214, %p215
      %p217 = scmp.ne.s32.totalorder %s206, %s209
      %p218 = scmp.eq.s32.totalorder %s32, 53
      %p219 = por %p217, %p218
      %p220 = scmp.ne.s32.totalorder %s209, %s210
      %p221 = scmp.eq.s32.totalorder %s32, 0
      %p222 = por %p220, %p221
      %p223 = scmp.ne.s32.totalorder %s209, %s210
      %p224 = scmp.eq.s32.totalorder %s33, 53
      %p225 = por %p223, %p224
      %p227 = scmp.ne.s32.totalorder %s210, %s226
      %p228 = scmp.eq.s32.totalorder %s33, 0
      %p229 = por %p227, %p228
      %p230 = scmp.le.s32.totalorder 1, %s27
      %p231 = scmp.lt.s32.totalorder %s27, 55
      %p232 = pnand %p230, %p231
      %p233 = pneg %p232
      // Predicated region
      $region9: #{tpu_custom_call.1} parent=5 // pred_check
        _
      $region10: #{tpu_custom_call.1} parent=5 // pred_check_branch
        %235 = sbr.rel (%p232) target = $region12
      $region11: #{tpu_custom_call.1} parent=5 // pred_region
        %s236 = ssub.s32 %s27, 1
      $region12: #{tpu_custom_call.1} parent=5 // pred_fallthru
        _
      %p237 = scmp.lt.s32.totalorder %s27, 54
      // Predicated region
      $region13: #{tpu_custom_call.1} parent=5 // pred_check
        %p238 = pneg %p237
      $region14: #{tpu_custom_call.1} parent=5 // pred_check_branch
        %240 = sbr.rel (%p238) target = $region16
      $region15: #{tpu_custom_call.1} parent=5 // pred_region
        // Predicated region
        $region17: #{tpu_custom_call.1} parent=15 // pred_check
          %p241 = pneg %p68
        $region18: #{tpu_custom_call.1} parent=15 // pred_check_branch
          %243 = sbr.rel (%p241) target = $region20
        $region19: #{tpu_custom_call.1} parent=15 // pred_region
          %s244 = sand.u32 %s58, 1
          %s245 = scalar_lea.sflag [#allocation3], %s244
          %s246 = sand.u32 %s58, 1
          %s247 = smul.addr %s246, 16
          %s248 = scalar_lea.vmem [#allocation2], %s247
          %s250 = ssub.s32 256, 256
          %251 = vsyncadd %s245, %s250
          %s252 = smul.addr %s34, 4
          %s253 = sadd.s32 %s35, %s252
          %s254 = smul.addr %s253, 64
          %s255 = scalar_lea.hbm %s0, %s254
          %s256 = sshll.u32 %s248, 4
          %s257 = int_to_ptr.vmem [resolvable:$true] %s256
          %262 = dma.hbm_to_vmem [thread:$0]  %s255, 256, %s257, %s245, 64, 64, 4
        $region20: #{tpu_custom_call.1} parent=15 // pred_fallthru
          _
        // Predicated region
        $region21: #{tpu_custom_call.1} parent=15 // pred_check
          %p263 = pneg %p96
        $region22: #{tpu_custom_call.1} parent=15 // pred_check_branch
          %265 = sbr.rel (%p263) target = $region24
        $region23: #{tpu_custom_call.1} parent=15 // pred_region
          %s266 = sand.u32 %s27, 1
          %s267 = scalar_lea.sflag [#allocation6], %s266
          %s268 = sand.u32 %s86, 1
          %s269 = smul.addr %s268, 4
          %s270 = scalar_lea.vmem [#allocation5], %s269
          %s272 = ssub.s32 64, 64
          %273 = vsyncadd %s267, %s272
          %s274 = sadd.s32 %s35, %s34
          %s275 = smul.addr %s274, 64
          %s276 = scalar_lea.hbm %s1, %s275
          %s278 = sshll.u32 %s270, 4
          %s279 = int_to_ptr.vmem [resolvable:$true] %s278
          %281 = dma.hbm_to_vmem [thread:$0]  %s276, 64, %s279, %s267
        $region24: #{tpu_custom_call.1} parent=15 // pred_fallthru
          _
        // Predicated region
        $region25: #{tpu_custom_call.1} parent=15 // pred_check
          %p282 = pneg %p126
        $region26: #{tpu_custom_call.1} parent=15 // pred_check_branch
          %284 = sbr.rel (%p282) target = $region28
        $region27: #{tpu_custom_call.1} parent=15 // pred_region
          %s285 = sand.u32 %s27, 1
          %s286 = scalar_lea.sflag [#allocation6], %s285
          %s287 = sand.u32 %s116, 1
          %s288 = smul.addr %s287, 16
          %s289 = scalar_lea.vmem [#allocation7], %s288
          %s291 = ssub.s32 256, 256
          %292 = vsyncadd %s286, %s291
          %s293 = smul.addr %s36, 4
          %s294 = sadd.s32 %s35, %s293
          %s295 = smul.addr %s34, 108
          %s296 = sadd.s32 %s294, %s295
          %s297 = smul.addr %s296, 64
          %s298 = scalar_lea.hbm %s2, %s297
          %s299 = sshll.u32 %s289, 4
          %s300 = int_to_ptr.vmem [resolvable:$true] %s299
          %305 = dma.hbm_to_vmem [thread:$0]  %s298, 256, %s300, %s286, 64, 64, 4
        $region28: #{tpu_custom_call.1} parent=15 // pred_fallthru
          _
        // Predicated region
        $region29: #{tpu_custom_call.1} parent=15 // pred_check
          %p306 = pneg %p156
        $region30: #{tpu_custom_call.1} parent=15 // pred_check_branch
          %308 = sbr.rel (%p306) target = $region32
        $region31: #{tpu_custom_call.1} parent=15 // pred_region
          %s309 = sand.u32 %s146, 1
          %s310 = scalar_lea.sflag [#allocation9], %s309
          %s311 = sand.u32 %s146, 1
          %s312 = smul.addr %s311, 4
          %s313 = scalar_lea.vmem [#allocation8], %s312
          %s315 = ssub.s32 64, 64
          %316 = vsyncadd %s310, %s315
          %s317 = sadd.s32 %s35, %s36
          %s318 = smul.addr %s34, 27
          %s319 = sadd.s32 %s317, %s318
          %s320 = smul.addr %s319, 64
          %s321 = scalar_lea.hbm %s3, %s320
          %s323 = sshll.u32 %s313, 4
          %s324 = int_to_ptr.vmem [resolvable:$true] %s323
          %326 = dma.hbm_to_vmem [thread:$0]  %s321, 64, %s324, %s310
        $region32: #{tpu_custom_call.1} parent=15 // pred_fallthru
          _
      $region16: #{tpu_custom_call.1} parent=5 // pred_fallthru
        _
      %p327 = scmp.le.s32.totalorder 1, %s27
      %p328 = scmp.lt.s32.totalorder %s27, 55
      %p329 = pnand %p327, %p328
      %p330 = pneg %p329
      // Predicated region
      $region33: #{tpu_custom_call.1} parent=5 // pred_check
        _
      $region34: #{tpu_custom_call.1} parent=5 // pred_check_branch
        %332 = sbr.rel (%p329) target = $region36
      $region35: #{tpu_custom_call.1} parent=5 // pred_region
        %s333 = ssub.s32 %s27, 1
        %s334 = sand.u32 %s61, 1
        %s335 = scalar_lea.sflag [#allocation3], %s334
        %s336 = sand.u32 %s61, 1
        %s337 = smul.addr %s336, 16
        %s338 = scalar_lea.vmem [#allocation2], %s337
        // Predicated region
        $region37: #{tpu_custom_call.1} parent=35 // pred_check
          %p339 = pneg %p74
        $region38: #{tpu_custom_call.1} parent=35 // pred_check_branch
          %341 = sbr.rel (%p339) target = $region40
        $region39: #{tpu_custom_call.1} parent=35 // pred_region
          %342 = dma.done %s335, 256
        $region40: #{tpu_custom_call.1} parent=35 // pred_fallthru
          _
        %s343 = sand.u32 %s32, 1
        %s344 = scalar_lea.sflag [#allocation6], %s343
        %s345 = sand.u32 %s89, 1
        %s346 = smul.addr %s345, 4
        %s347 = scalar_lea.vmem [#allocation5], %s346
        // Predicated region
        $region41: #{tpu_custom_call.1} parent=35 // pred_check
          %p348 = pneg %p102
        $region42: #{tpu_custom_call.1} parent=35 // pred_check_branch
          %350 = sbr.rel (%p348) target = $region44
        $region43: #{tpu_custom_call.1} parent=35 // pred_region
          %351 = dma.done %s344, 64
        $region44: #{tpu_custom_call.1} parent=35 // pred_fallthru
          _
        %s352 = sand.u32 %s32, 1
        %s353 = scalar_lea.sflag [#allocation6], %s352
        %s354 = sand.u32 %s119, 1
        %s355 = smul.addr %s354, 16
        %s356 = scalar_lea.vmem [#allocation7], %s355
        // Predicated region
        $region45: #{tpu_custom_call.1} parent=35 // pred_check
          %p357 = pneg %p132
        $region46: #{tpu_custom_call.1} parent=35 // pred_check_branch
          %359 = sbr.rel (%p357) target = $region48
        $region47: #{tpu_custom_call.1} parent=35 // pred_region
          %360 = dma.done %s353, 256
        $region48: #{tpu_custom_call.1} parent=35 // pred_fallthru
          _
        %s361 = sand.u32 %s149, 1
        %s362 = scalar_lea.sflag [#allocation9], %s361
        %s363 = sand.u32 %s149, 1
        %s364 = smul.addr %s363, 4
        %s365 = scalar_lea.vmem [#allocation8], %s364
        // Predicated region
        $region49: #{tpu_custom_call.1} parent=35 // pred_check
          %p366 = pneg %p162
        $region50: #{tpu_custom_call.1} parent=35 // pred_check_branch
          %368 = sbr.rel (%p366) target = $region52
        $region51: #{tpu_custom_call.1} parent=35 // pred_region
          %369 = dma.done %s362, 64
        $region52: #{tpu_custom_call.1} parent=35 // pred_fallthru
          _
        %s370 = sand.u32 %s61, 1
        %s371 = scalar_lea.sflag [#allocation3], %s370
        %s372 = sand.u32 %s61, 1
        %s373 = smul.addr %s372, 16
        %s374 = scalar_lea.vmem [#allocation2], %s373
        %p375 = pneg %p74
        %p376 = pneg %p71
        %s377 = sand.u32 %s32, 1
        %s378 = scalar_lea.sflag [#allocation6], %s377
        %s379 = sand.u32 %s89, 1
        %s380 = smul.addr %s379, 4
        %s381 = scalar_lea.vmem [#allocation5], %s380
        %p382 = pneg %p102
        %p383 = pneg %p99
        %s384 = sand.u32 %s32, 1
        %s385 = scalar_lea.sflag [#allocation6], %s384
        %s386 = sand.u32 %s119, 1
        %s387 = smul.addr %s386, 16
        %s388 = scalar_lea.vmem [#allocation7], %s387
        %p389 = pneg %p132
        %p390 = pneg %p129
        %s391 = sand.u32 %s149, 1
        %s392 = scalar_lea.sflag [#allocation9], %s391
        %s393 = sand.u32 %s149, 1
        %s394 = smul.addr %s393, 4
        %s395 = scalar_lea.vmem [#allocation8], %s394
        %p396 = pneg %p162
        %p397 = pneg %p159
        %p398 = pneg %p192
        %p399 = pneg %p189
        %s400 = sand.u32 %s179, 1
        %s401 = scalar_lea.sflag [#allocation4], %s400
        %s402 = sand.u32 %s179, 1
        %s403 = smul.addr %s402, 4
        %s404 = scalar_lea.vmem [#allocation10], %s403
        %p405 = pneg %p222
        %p406 = pneg %p219
        %s407 = sand.u32 %s209, 1
        %s408 = scalar_lea.sflag [#allocation12], %s407
        %s409 = sand.u32 %s209, 1
        %s410 = smul.addr %s409, 4
        %s411 = scalar_lea.vmem [#allocation11], %s410
        %v412 = vld [vmem:[%s338] sm:$0xf]
        %v413 = vld [vmem:[%s338 + $0x4] sm:$0xf]
        %v414 = vld [vmem:[%s338 + $0x8] sm:$0xf]
        %v415 = vld [vmem:[%s338 + $0xc] sm:$0xf]
        %v416 = vld [vmem:[%s356] sm:$0xf]
        %v417 = vld [vmem:[%s356 + $0x4] sm:$0xf]
        %v418 = vld [vmem:[%s356 + $0x8] sm:$0xf]
        %v419 = vld [vmem:[%s356 + $0xc] sm:$0xf]
        %v420 = vmul.f32 %v412, %v416
        %v421 = vmul.f32 %v413, %v417
        %v422 = vmul.f32 %v414, %v418
        %v423 = vmul.f32 %v415, %v419
        %vm424 = vcmask 1043456
        %v425 = vsel %vm424, %v420, 0.0
        %v426 = vsel %vm424, %v421, 0.0
        %v427 = vadd.f32 %v425, %v426
        %v428 = vsel %vm424, %v422, 0.0
        %v429 = vadd.f32 %v427, %v428
        %v430 = vsel %vm424, %v423, 0.0
        %v431 = vadd.f32 %v429, %v430
        %v432 = vrcp.pop 4.0
        %v433 = vmul.f32 %v431, %v432
        %434 = vst [vmem:[%s404] sm:$0xf] %v433
        %v435 = vld [vmem:[%s347] sm:$0xf]
        %v436 = vld [vmem:[%s365] sm:$0xf]
        %v437 = vmul.f32 %v435, %v436
        %v438 = vadd.f32 %v437, 0.0
        %v439 = vmax.f32 %v438, 0.0
        %v440 = vmin.f32 %v439, 1.0
        %441 = vst [vmem:[%s411] sm:$0xf] %v440
        %s442 = sand.u32 %s179, 1
        %s443 = scalar_lea.sflag [#allocation4], %s442
        %s444 = sand.u32 %s179, 1
        %s445 = smul.addr %s444, 4
        %s446 = scalar_lea.vmem [#allocation10], %s445
        %s447 = sand.u32 %s209, 1
        %s448 = scalar_lea.sflag [#allocation12], %s447
        %s449 = sand.u32 %s209, 1
        %s450 = smul.addr %s449, 4
        %s451 = scalar_lea.vmem [#allocation11], %s450
        // Predicated region
        $region53: #{tpu_custom_call.1} parent=35 // pred_check
          %p452 = pneg %p189
        $region54: #{tpu_custom_call.1} parent=35 // pred_check_branch
          %454 = sbr.rel (%p452) target = $region56
        $region55: #{tpu_custom_call.1} parent=35 // pred_region
          %s456 = ssub.s32 64, 64
          %457 = vsyncadd %s443, %s456
          %s458 = sadd.s32 %s38, %s39
          %s459 = smul.addr %s37, 27
          %s460 = sadd.s32 %s458, %s459
          %s461 = smul.addr %s460, 64
          %s462 = scalar_lea.hbm %s4, %s461
          %s464 = sshll.u32 %s446, 4
          %s465 = int_to_ptr.vmem [resolvable:$true] %s464
          %467 = dma.vmem_to_hbm [thread:$0]  %s465, 64, %s462, %s443
        $region56: #{tpu_custom_call.1} parent=35 // pred_fallthru
          _
        // Predicated region
        $region57: #{tpu_custom_call.1} parent=35 // pred_check
          %p468 = pneg %p219
        $region58: #{tpu_custom_call.1} parent=35 // pred_check_branch
          %470 = sbr.rel (%p468) target = $region60
        $region59: #{tpu_custom_call.1} parent=35 // pred_region
          %s472 = ssub.s32 64, 64
          %473 = vsyncadd %s448, %s472
          %s474 = sadd.s32 %s38, %s39
          %s475 = smul.addr %s37, 27
          %s476 = sadd.s32 %s474, %s475
          %s477 = smul.addr %s476, 64
          %s478 = scalar_lea.hbm %s5, %s477
          %s480 = sshll.u32 %s451, 4
          %s481 = int_to_ptr.vmem [resolvable:$true] %s480
          %483 = dma.vmem_to_hbm [thread:$0]  %s481, 64, %s478, %s448
        $region60: #{tpu_custom_call.1} parent=35 // pred_fallthru
          _
      $region36: #{tpu_custom_call.1} parent=5 // pred_fallthru
        _
      %p484 = scmp.le.s32.totalorder 2, %s27
      // Predicated region
      $region61: #{tpu_custom_call.1} parent=5 // pred_check
        %p485 = pneg %p484
      $region62: #{tpu_custom_call.1} parent=5 // pred_check_branch
        %487 = sbr.rel (%p485) target = $region64
      $region63: #{tpu_custom_call.1} parent=5 // pred_region
        %s488 = ssub.s32 %s27, 2
        // Predicated region
        $region65: #{tpu_custom_call.1} parent=63 // pred_check
          %p489 = pneg %p195
        $region66: #{tpu_custom_call.1} parent=63 // pred_check_branch
          %491 = sbr.rel (%p489) target = $region68
        $region67: #{tpu_custom_call.1} parent=63 // pred_region
          %s492 = sand.u32 %s180, 1
          %s493 = scalar_lea.sflag [#allocation4], %s492
          %s494 = sand.u32 %s180, 1
          %s495 = smul.addr %s494, 4
          %s496 = scalar_lea.vmem [#allocation10], %s495
          %497 = dma.done %s493, 64
        $region68: #{tpu_custom_call.1} parent=63 // pred_fallthru
          _
        // Predicated region
        $region69: #{tpu_custom_call.1} parent=63 // pred_check
          %p498 = pneg %p225
        $region70: #{tpu_custom_call.1} parent=63 // pred_check_branch
          %500 = sbr.rel (%p498) target = $region72
        $region71: #{tpu_custom_call.1} parent=63 // pred_region
          %s501 = sand.u32 %s210, 1
          %s502 = scalar_lea.sflag [#allocation12], %s501
          %s503 = sand.u32 %s210, 1
          %s504 = smul.addr %s503, 4
          %s505 = scalar_lea.vmem [#allocation11], %s504
          %506 = dma.done %s502, 64
        $region72: #{tpu_custom_call.1} parent=63 // pred_fallthru
          _
      $region64: #{tpu_custom_call.1} parent=5 // pred_fallthru
        _
    $region6: #{tpu_custom_call.1} parent=1 // loop_footer
      %s31 = sadd.s32 1, %s27
    $region7: #{tpu_custom_call.1} parent=1 // loop_footer_branch
      %26 = sbr.rel target = $region3
    $region8: #{tpu_custom_call.1} parent=1 // loop_exit
      _
    %507 = vsyncpa [#allocation3], 1
    %s508 = scalar_lea.sflag [#allocation3], 1
    %509 = vsyncpa %s508, 1
    %510 = vsyncpa [#allocation6], 1
    %s511 = scalar_lea.sflag [#allocation6], 1
    %512 = vsyncpa %s511, 1
    %513 = vsyncpa [#allocation9], 1
    %s514 = scalar_lea.sflag [#allocation9], 1
    %515 = vsyncpa %s514, 1
    %516 = vsyncpa [#allocation4], 1
    %s517 = scalar_lea.sflag [#allocation4], 1
    %518 = vsyncpa %s517, 1
    %519 = vsyncpa [#allocation12], 1
    %s520 = scalar_lea.sflag [#allocation12], 1
    %521 = vsyncpa %s520, 1

</llo_original>
